<compile_context>
chip_gen: v6e
topology: v6e:2x2x1
jax: 0.10.0
libtpu: 0.0.40
codegen_flags: <defaults>
</compile_context>

<pallas_src>
import functools

import jax
import jax.numpy as jnp
from jax.experimental import pallas as pl
from jax.experimental.pallas import tpu as pltpu


def _round_up(x, m):
    return (x + m - 1) // m * m


def _gap_kernel(x_ref, o_ref, acc_ref, *, inv_s):
    """Row-wise mean over the (tiled) last axis.

    x_ref  : (tr, ts) tile of the (rows, spatial) input
    o_ref  : (tr, 1)  per-row mean, written on the last reduction step
    acc_ref: (tr, 1)  f32 VMEM accumulator, resident across the reduction axis
    """
    s_step = pl.program_id(1)

    @pl.when(s_step == 0)
    def _init():
        acc_ref[...] = jnp.zeros_like(acc_ref)

    acc_ref[...] += jnp.sum(x_ref[...].astype(jnp.float32), axis=1, keepdims=True)

    @pl.when(s_step == pl.num_programs(1) - 1)
    def _finalize():
        o_ref[...] = (acc_ref[...] * inv_s).astype(o_ref.dtype)


def global_avg_pool2d(x, *, row_tile=256, s_tile=2048):
    """x: (B, C, H, W) -> (B, C)   (== F.avg_pool2d(x, (H, W)).view(-1, C))."""
    B, C, H, W = x.shape
    S = H * W
    R = B * C

    # Free reshape: NCHW is row-major, so each (b, c) row is contiguous over H*W.
    x2 = x.reshape(R, S)

    tr = min(row_tile, _round_up(R, 8))      # sublane-aligned row tile
    ts = min(s_tile, _round_up(S, 128))      # lane-aligned spatial tile
    r_pad = _round_up(R, tr)
    s_pad = _round_up(S, ts)
    if (r_pad, s_pad) != (R, S):
        # Zero padding is sound: padded zeros add nothing to the sums, and we
        # divide by the true S (not the padded S) in the kernel.
        x2 = jnp.pad(x2, ((0, r_pad - R), (0, s_pad - S)))

    grid = (r_pad // tr, s_pad // ts)

    out = pl.pallas_call(
        functools.partial(_gap_kernel, inv_s=1.0 / float(S)),
        out_shape=jax.ShapeDtypeStruct((r_pad, 1), x.dtype),
        grid=grid,
        in_specs=[pl.BlockSpec((tr, ts), lambda r, s: (r, s))],
        out_specs=pl.BlockSpec((tr, 1), lambda r, s: (r, 0)),
        scratch_shapes=[pltpu.VMEM((tr, 1), jnp.float32)],
        compiler_params=pltpu.CompilerParams(
            dimension_semantics=("parallel", "arbitrary"),
        ),
    )(x2)

    return out[:R, 0].reshape(B, C)


if __name__ == "__main__":
    key = jax.random.PRNGKey(0)
    k1, k2 = jax.random.split(key)

    # Small shape consistent with the module: (B, C, H, W) = (2, 4, 16, 16).
    x = jax.random.normal(k1, (2, 4, 16, 16), jnp.float32)
    y = jax.jit(global_avg_pool2d)(x)
    jax.block_until_ready(y)
    assert y.shape == (2, 4) and y.dtype == jnp.float32
    ref = jnp.mean(x, axis=(2, 3))
    assert jnp.allclose(y, ref, rtol=1e-4, atol=1e-5)

    # Second case exercising a multi-step reduction and padded remainder tiles.
    x2 = jax.random.normal(k2, (2, 3, 48, 40), jnp.float32)   # S=1920, R=6
    y2 = jax.jit(functools.partial(global_avg_pool2d, s_tile=512))(x2)
    jax.block_until_ready(y2)
    ref2 = jnp.mean(x2, axis=(2, 3))
    assert y2.shape == (2, 3)
    assert jnp.allclose(y2, ref2, rtol=1e-4, atol=1e-5)

    print("KERNEL_OK")
</pallas_src>

<mosaic_0001>
module attributes {stable_mosaic.version = 11 : i64} {
  func.func @_gap_kernel(%arg0: i32, %arg1: i32, %arg2: memref<8x256xf32, #tpu.memory_space<vmem>>, %arg3: memref<8x1xf32, #tpu.memory_space<vmem>>, %arg4: memref<8x1xf32, #tpu.memory_space<vmem>>) attributes {dimension_semantics = [#tpu.dimension_semantics<parallel>, #tpu.dimension_semantics<arbitrary>], iteration_bounds = array<i64: 1, 1>, scalar_prefetch = 0 : i64, scratch_operands = 1 : i64, tpu.core_type = #tpu.core_type<tc>, window_params = [{transform_indices = @transform_0, window_bounds = array<i64: 8, 256>}, {transform_indices = @transform_1, window_bounds = array<i64: 8, 1>}]} {
    %c0_i32 = arith.constant 0 : i32
    %0 = arith.cmpi eq, %arg1, %c0_i32 : i32
    %1 = arith.extui %0 : i1 to i32
    %c0_i32_0 = arith.constant 0 : i32
    %2 = arith.cmpi ne, %1, %c0_i32_0 : i32
    scf.if %2 {
      %cst_8 = arith.constant 0.000000e+00 : f32
      %12 = vector.broadcast %cst_8 : f32 to vector<8x1xf32>
      %c0_9 = arith.constant 0 : index
      %c0_10 = arith.constant 0 : index
      %13 = vector.load %arg4[%c0_9, %c0_10] : memref<8x1xf32, #tpu.memory_space<vmem>>, vector<8x1xf32>
      tpu.vector_store %arg4[%c0_9, %c0_10], %12 {strides = array<i32>} : memref<8x1xf32, #tpu.memory_space<vmem>>, vector<8x1xf32>,
    } else {
    }
    %c0 = arith.constant 0 : index
    %c0_1 = arith.constant 0 : index
    %3 = vector.load %arg4[%c0, %c0_1] : memref<8x1xf32, #tpu.memory_space<vmem>>, vector<8x1xf32>
    %c0_2 = arith.constant 0 : index
    %c0_3 = arith.constant 0 : index
    %4 = vector.load %arg2[%c0_2, %c0_3] : memref<8x256xf32, #tpu.memory_space<vmem>>, vector<8x256xf32>
    %cst = arith.constant dense<0.000000e+00> : vector<8xf32>
    %5 = vector.multi_reduction <add>, %4, %cst [1] : vector<8x256xf32> to vector<8xf32>
    %6 = vector.shape_cast %5 : vector<8xf32> to vector<8x1xf32>
    %7 = arith.addf %3, %6 : vector<8x1xf32>
    %c0_4 = arith.constant 0 : index
    %c0_5 = arith.constant 0 : index
    %8 = vector.load %arg4[%c0_4, %c0_5] : memref<8x1xf32, #tpu.memory_space<vmem>>, vector<8x1xf32>
    tpu.vector_store %arg4[%c0_4, %c0_5], %7 {strides = array<i32>} : memref<8x1xf32, #tpu.memory_space<vmem>>, vector<8x1xf32>,
    %c0_i32_6 = arith.constant 0 : i32
    %9 = arith.cmpi eq, %arg1, %c0_i32_6 : i32
    %10 = arith.extui %9 : i1 to i32
    %c0_i32_7 = arith.constant 0 : i32
    %11 = arith.cmpi ne, %10, %c0_i32_7 : i32
    scf.if %11 {
      %c0_8 = arith.constant 0 : index
      %c0_9 = arith.constant 0 : index
      %12 = vector.load %arg4[%c0_8, %c0_9] : memref<8x1xf32, #tpu.memory_space<vmem>>, vector<8x1xf32>
      %cst_10 = arith.constant 3.906250e-03 : f32
      %13 = vector.broadcast %cst_10 : f32 to vector<8x1xf32>
      %14 = arith.mulf %12, %13 : vector<8x1xf32>
      %c0_11 = arith.constant 0 : index
      %c0_12 = arith.constant 0 : index
      %15 = vector.load %arg3[%c0_11, %c0_12] : memref<8x1xf32, #tpu.memory_space<vmem>>, vector<8x1xf32>
      tpu.vector_store %arg3[%c0_11, %c0_12], %14 {strides = array<i32>} : memref<8x1xf32, #tpu.memory_space<vmem>>, vector<8x1xf32>,
    } else {
    }
    return
  }
  func.func @transform_0(%arg0: i32, %arg1: i32) -> (i32, i32) {
    %c0_i32 = arith.constant 0 : i32
    return %arg0, %arg1 : i32, i32
  }
  func.func @transform_1(%arg0: i32, %arg1: i32) -> (i32, i32) {
    %c0_i32 = arith.constant 0 : i32
    %c0_i32_0 = arith.constant 0 : i32
    return %arg0, %c0_i32 : i32, i32
  }
}

</mosaic_0001>

<llo_original>
// kernel: squeeze.1
$region0: #{squeeze.1}
  %s0 = inlined_call_operand.vmem [shape: f32[8], index: 0, kind: input, shape index: {}]
  %s1 = inlined_call_operand.hbm [shape: f32[2,4], index: 1, kind: output, shape index: {}]
  $region1: #{squeeze.1} parent=0
    #allocation0 [shape = 'u8[1024]{0}', space=vmem, size = 0x400, scoped, tag = 'operand span for operand 1']
    #allocation1 [shape = 's32[1]{0}', space=sflag, size = 0x4, scoped, tag = 'scoped memory for squeeze.1']
    #allocation2 [shape = 'u8[4096]{0}', space=vmem, size = 0x1000, scoped, tag = 'scoped mem for output reshape']
    #allocation3 [shape = 'u8[4096]{0}', space=vmem, size = 0x1000, scoped, tag = 'scoped mem for input reshape']
    %2 = vsyncpa [#allocation1], 0
    %s4 = sshll.u32 1, 1
    %s5 = ssub.s32 %s4, 1
    %v6 = vld [vmem:[%s0] sm:%s5]
    %7 = vst [vmem:[#allocation3] sm:%s5] %v6
    %v8 = vld [vmem:[#allocation3] sm:$0x1]
    %vm9 = vcmask 31744
    %10 = vst.msk [vmem:[#allocation2] sm:$0x1] %vm9, %v8
    %v11 = vld [vmem:[#allocation3] sm:$0x1]
    %12 = vrot.lane.b32.xlu0 %v11, 124
    %v13 = vpop.permute.xlu0 %12
    %vm14 = vcmask 31744
    %s15 = scalar_lea.vmem [#allocation2], 1
    %16 = vst.msk [vmem:[%s15] sm:$0x1] %vm14, %v13
    %s18 = sshll.u32 1, 2
    %s19 = ssub.s32 %s18, 1
    %v21 = vld [vmem:[#allocation2] sm:%s19]
    %s22 = sshll.u32 1, 2
    %s23 = ssub.s32 %s22, 1
    %24 = vst [vmem:[#allocation0] sm:%s23] %v21
    %s26 = ssub.s32 32, 32
    %27 = vsyncadd [#allocation1], %s26
    %s29 = sshll.u32 [#allocation0], 4
    %s30 = int_to_ptr.vmem [resolvable:$true] %s29
    %32 = dma.vmem_to_hbm [thread:$0]  %s30, 32, %s1, [#allocation1]
    %33 = dma.done [#allocation1], 32
    %34 = vsyncpa [#allocation1], 1

// kernel: global_avg_pool2d.1
$region0: #{global_avg_pool2d.1}
  #allocation0 [shape = 'u32[]', space=smem, size = 0x4, offset = 0x4, fixed_abs, tag = 'smem constant byte address 0x4 - core index']
  #allocation1 [shape = 'u32[144,128]{1,0:T(1,128)}', space=vmem, size = 0x12000, scoped, tag = 'internal scratch']
  #allocation2 [shape = 'f32[8,1]{1,0:T(8,128)}', space=vmem, size = 0x1000, scoped, tag = 'scratch operand']
  %s0 = inlined_call_operand.vmem [shape: f32[8,256], index: 0, kind: input, shape index: {}]
  %s1 = inlined_call_operand.vmem [shape: f32[8,1], index: 1, kind: output, shape index: {}]
  %s2 = sld [smem:[#allocation0]]
  $region22: #{global_avg_pool2d.1} parent=0
    _
  %s4 = ssub.s32 1, %s2
  %s5 = scalar_select 0, %s4, %s2
  // Predicated region
  $region2: #{global_avg_pool2d.1} parent=0 // pred_check
    _
  $region3: #{global_avg_pool2d.1} parent=0 // pred_check_branch
    %7 = sbr.rel (0) target = $region5
  $region4: #{global_avg_pool2d.1} parent=0 // pred_region
    _
  $region5: #{global_avg_pool2d.1} parent=0 // pred_fallthru
    _
  %p8 = scmp.eq.s32.totalorder 0, 0
  // Predicated region
  $region6: #{global_avg_pool2d.1} parent=0 // pred_check
    %p9 = pneg %p8
  $region7: #{global_avg_pool2d.1} parent=0 // pred_check_branch
    %11 = sbr.rel (%p9) target = $region9
  $region8: #{global_avg_pool2d.1} parent=0 // pred_region
    %vm12 = vcmask 7168
    %13 = vst.msk [vmem:[#allocation2] sm:$0xff] %vm12, 0.0
  $region9: #{global_avg_pool2d.1} parent=0 // pred_fallthru
    _
  %v14 = vld [vmem:[#allocation2] sm:$0xff]
  %v15 = vld [vmem:[%s0] sm:$0xff]
  %v16 = vld [vmem:[%s0 + $0x8] sm:$0xff]
  %v17 = vadd.f32 %v15, %v16
  %18 = vadd.xlane.f32.xlu0 %v17
  %v19 = vpop.xlane.xlu0 %18
  %v20 = vadd.f32 %v14, %v19
  %vm21 = vcmask 7168
  %22 = vst.msk [vmem:[#allocation2] sm:$0xff] %vm21, %v20
  // Predicated region
  $region10: #{global_avg_pool2d.1} parent=0 // pred_check
    %p23 = pneg %p8
  $region11: #{global_avg_pool2d.1} parent=0 // pred_check_branch
    %25 = sbr.rel (%p23) target = $region13
  $region12: #{global_avg_pool2d.1} parent=0 // pred_region
    %v26 = vld [vmem:[#allocation2] sm:$0xff]
    %v27 = vmul.f32 %v26, 0.00390625
    %28 = vst.msk [vmem:[%s1] sm:$0xff] %vm21, %v27
  $region13: #{global_avg_pool2d.1} parent=0 // pred_fallthru
    _
  // Predicated region
  $region14: #{global_avg_pool2d.1} parent=0 // pred_check
    _
  $region15: #{global_avg_pool2d.1} parent=0 // pred_check_branch
    %30 = sbr.rel (0) target = $region17
  $region16: #{global_avg_pool2d.1} parent=0 // pred_region
    _
  $region17: #{global_avg_pool2d.1} parent=0 // pred_fallthru
    _
  // Predicated region
  $region18: #{global_avg_pool2d.1} parent=0 // pred_check
    _
  $region19: #{global_avg_pool2d.1} parent=0 // pred_check_branch
    %32 = sbr.rel (0) target = $region21
  $region20: #{global_avg_pool2d.1} parent=0 // pred_region
    _
  $region21: #{global_avg_pool2d.1} parent=0 // pred_fallthru
    _

</llo_original>
